<compile_context>
chip_gen: v6e
topology: v6e:2x2x1
jax: 0.10.0
libtpu: 0.0.40
codegen_flags: <defaults>
</compile_context>

<pallas_src>
import math

import jax
import jax.numpy as jnp
from jax.experimental import pallas as pl
from jax.experimental.pallas import tpu as pltpu

_HALF_LOG_2PI = 0.5 * math.log(2.0 * math.pi)
_LOG_STD_MIN = -20.0
_LOG_STD_MAX = 2.0


def policy_kernel(x_ref, a_ref, w1_ref, b1_ref, w2_ref, b2_ref,
                  wmu_ref, bmu_ref, logstd_ref, mean_t_ref, logp_t_ref):
    # MLP trunk: two Linear + ReLU layers, f32 accumulation on the MXU.
    h = jnp.dot(x_ref[...], w1_ref[...], preferred_element_type=jnp.float32)
    h = jnp.maximum(h + b1_ref[...], 0.0)
    h = jnp.dot(h, w2_ref[...], preferred_element_type=jnp.float32)
    h = jnp.maximum(h + b2_ref[...], 0.0)

    # Gaussian head: mean = h @ Wmu + bmu
    mean = jnp.dot(h, wmu_ref[...], preferred_element_type=jnp.float32) + bmu_ref[...]

    # Diagonal-Normal log prob of the supplied action, summed over action dims
    # (VPU multiply + lane reduce; no MXU involvement in the epilogue).
    log_std = jnp.clip(logstd_ref[...], _LOG_STD_MIN, _LOG_STD_MAX)   # (1, A)
    z = (a_ref[...] - mean) * jnp.exp(-log_std)                       # (TB, A)
    lp = -0.5 * z * z - log_std - _HALF_LOG_2PI                       # (TB, A)
    lp_sum = jnp.sum(lp, axis=-1, keepdims=True)                      # (TB, 1)

    # Lane-dense stores: put the batch dimension along lanes.
    mean_t_ref[...] = mean.T                                          # (A, TB)
    logp_t_ref[...] = lp_sum.T                                        # (1, TB)


def _round_up(x, m):
    return ((x + m - 1) // m) * m


def _pick_tile_b(batch):
    if batch >= 1024:
        return 1024
    if batch >= 512:
        return 512
    return _round_up(batch, 8)


def policy_forward(obs, params, action=None):
    """Pallas forward for Policy (Box / Gaussian fixed-std head, no encoder).

    obs:    (B, obs_dim) float32
    action: (B, action_dim) or (B,) float32, or None
    params: (w1, b1, w2, b2, w_mu, b_mu, log_std), weights stored as (in, out).

    Returns ((mean, std), log_prob): mean (B, action_dim), std (1, action_dim),
    log_prob (B, 1) or None — mirroring `return (pi, log_prob)` of the module.
    """
    w1, b1, w2, b2, w_mu, b_mu, log_std = params
    B, obs_dim = obs.shape
    A = w_mu.shape[1]

    have_action = action is not None
    if have_action:
        if action.ndim <= 1:
            action = action[:, None]              # matches `action.unsqueeze(-1)`
        action = action.astype(jnp.float32)
    else:
        action = jnp.zeros((B, A), jnp.float32)

    tile_b = _pick_tile_b(B)
    Bp = _round_up(B, tile_b)
    if Bp != B:
        obs = jnp.pad(obs, ((0, Bp - B), (0, 0)))
        action = jnp.pad(action, ((0, Bp - B), (0, 0)))
    n_tiles = Bp // tile_b

    def resident(shape):
        return pl.BlockSpec(shape, lambda i: (0, 0))

    mean_t, logp_t = pl.pallas_call(
        policy_kernel,
        out_shape=(
            jax.ShapeDtypeStruct((A, Bp), jnp.float32),
            jax.ShapeDtypeStruct((1, Bp), jnp.float32),
        ),
        grid=(n_tiles,),
        in_specs=[
            pl.BlockSpec((tile_b, obs_dim), lambda i: (i, 0)),  # obs: streamed
            pl.BlockSpec((tile_b, A), lambda i: (i, 0)),        # action: streamed
            resident(w1.shape), resident(b1.shape),
            resident(w2.shape), resident(b2.shape),
            resident(w_mu.shape), resident(b_mu.shape),
            resident(log_std.shape),
        ],
        out_specs=(
            pl.BlockSpec((A, tile_b), lambda i: (0, i)),        # mean^T  (lane-dense)
            pl.BlockSpec((1, tile_b), lambda i: (0, i)),        # logp^T  (lane-dense)
        ),
        compiler_params=pltpu.CompilerParams(
            dimension_semantics=("parallel",)),
    )(obs, action, w1, b1, w2, b2, w_mu, b_mu, log_std)

    mean = mean_t[:, :B].T                                             # (B, A)
    std = jnp.exp(jnp.clip(log_std, _LOG_STD_MIN, _LOG_STD_MAX))       # (1, A)
    log_prob = logp_t[0, :B][:, None] if have_action else None         # (B, 1)
    return (mean, std), log_prob


def init_linear(kw, kb, fan_in, fan_out):
    """Deterministic init mimicking nn.Linear default U(-1/sqrt(fan_in), +)."""
    bound = 1.0 / math.sqrt(fan_in)
    w = jax.random.uniform(kw, (fan_in, fan_out), jnp.float32, -bound, bound)
    b = jax.random.uniform(kb, (1, fan_out), jnp.float32, -bound, bound)
    return w, b


if __name__ == "__main__":
    obs_dim = 16
    hidden = 64           # make_mlp architecture=[64, 64]
    action_dim = 4
    batch = 8

    key = jax.random.PRNGKey(0)
    ks = jax.random.split(key, 8)

    obs = jax.random.normal(ks[0], (batch, obs_dim), jnp.float32)
    act = jax.random.normal(ks[1], (batch, action_dim), jnp.float32)

    w1, b1 = init_linear(ks[2], ks[3], obs_dim, hidden)
    w2, b2 = init_linear(ks[4], ks[5], hidden, hidden)
    w_mu, b_mu = init_linear(ks[6], ks[7], hidden, action_dim)
    log_std = -0.5 * jnp.ones((1, action_dim), jnp.float32)
    params = (w1, b1, w2, b2, w_mu, b_mu, log_std)

    (mean, std), log_prob = policy_forward(obs, params, act)
    mean = jax.block_until_ready(mean)
    log_prob = jax.block_until_ready(log_prob)

    # Pure-JAX reference (same math).
    h = jnp.maximum(obs @ w1 + b1, 0.0)
    h = jnp.maximum(h @ w2 + b2, 0.0)
    mean_ref = h @ w_mu + b_mu
    ls = jnp.clip(log_std, _LOG_STD_MIN, _LOG_STD_MAX)
    std_ref = jnp.exp(ls)
    z = (act - mean_ref) / std_ref
    logp_ref = jnp.sum(-0.5 * z * z - ls - _HALF_LOG_2PI, axis=-1, keepdims=True)

    assert mean.shape == (batch, action_dim)
    assert std.shape == (1, action_dim)
    assert log_prob.shape == (batch, 1)
    assert jnp.allclose(mean, mean_ref, atol=1e-4, rtol=1e-4), "mean mismatch"
    assert jnp.allclose(std, std_ref, atol=1e-6), "std mismatch"
    assert jnp.allclose(log_prob, logp_ref, atol=1e-4, rtol=1e-4), "log_prob mismatch"

    print("KERNEL_OK")
</pallas_src>

<mosaic_0001>
module attributes {stable_mosaic.version = 11 : i64} {
  func.func @policy_kernel(%arg0: i32, %arg1: memref<8x16xf32, #tpu.memory_space<vmem>>, %arg2: memref<8x4xf32, #tpu.memory_space<vmem>>, %arg3: memref<16x64xf32, #tpu.memory_space<vmem>>, %arg4: memref<1x64xf32, #tpu.memory_space<vmem>>, %arg5: memref<64x64xf32, #tpu.memory_space<vmem>>, %arg6: memref<1x64xf32, #tpu.memory_space<vmem>>, %arg7: memref<64x4xf32, #tpu.memory_space<vmem>>, %arg8: memref<1x4xf32, #tpu.memory_space<vmem>>, %arg9: memref<1x4xf32, #tpu.memory_space<vmem>>, %arg10: memref<4x8xf32, #tpu.memory_space<vmem>>, %arg11: memref<1x8xf32, #tpu.memory_space<vmem>>) attributes {dimension_semantics = [#tpu.dimension_semantics<parallel>], iteration_bounds = array<i64: 1>, scalar_prefetch = 0 : i64, scratch_operands = 0 : i64, tpu.core_type = #tpu.core_type<tc>, window_params = [{transform_indices = @transform_0, window_bounds = array<i64: 8, 16>}, {transform_indices = @transform_1, window_bounds = array<i64: 8, 4>}, {pipeline_mode = #tpu.pipeline_mode<synchronous>, transform_indices = @transform_2, window_bounds = array<i64: 16, 64>}, {pipeline_mode = #tpu.pipeline_mode<synchronous>, transform_indices = @transform_3, window_bounds = array<i64: 1, 64>}, {pipeline_mode = #tpu.pipeline_mode<synchronous>, transform_indices = @transform_4, window_bounds = array<i64: 64, 64>}, {pipeline_mode = #tpu.pipeline_mode<synchronous>, transform_indices = @transform_5, window_bounds = array<i64: 1, 64>}, {pipeline_mode = #tpu.pipeline_mode<synchronous>, transform_indices = @transform_6, window_bounds = array<i64: 64, 4>}, {pipeline_mode = #tpu.pipeline_mode<synchronous>, transform_indices = @transform_7, window_bounds = array<i64: 1, 4>}, {pipeline_mode = #tpu.pipeline_mode<synchronous>, transform_indices = @transform_8, window_bounds = array<i64: 1, 4>}, {transform_indices = @transform_9, window_bounds = array<i64: 4, 8>}, {transform_indices = @transform_10, window_bounds = array<i64: 1, 8>}]} {
    %c0 = arith.constant 0 : index
    %c0_0 = arith.constant 0 : index
    %0 = vector.load %arg1[%c0, %c0_0] : memref<8x16xf32, #tpu.memory_space<vmem>>, vector<8x16xf32>
    %c0_1 = arith.constant 0 : index
    %c0_2 = arith.constant 0 : index
    %1 = vector.load %arg3[%c0_1, %c0_2] : memref<16x64xf32, #tpu.memory_space<vmem>>, vector<16x64xf32>
    %cst = arith.constant dense<0.000000e+00> : vector<8x64xf32>
    %2 = tpu.matmul %0, %1, %cst {dimension_numbers = #tpu.dot_dimension_numbers<[1], [0], [0], [1], [0, 0, 1, 1], [], []>} : vector<8x16xf32>, vector<16x64xf32>, vector<8x64xf32> -> vector<8x64xf32>
    %c0_3 = arith.constant 0 : index
    %c0_4 = arith.constant 0 : index
    %3 = vector.load %arg4[%c0_3, %c0_4] : memref<1x64xf32, #tpu.memory_space<vmem>>, vector<1x64xf32>
    %4 = vector.broadcast %3 : vector<1x64xf32> to vector<8x64xf32>
    %5 = arith.addf %2, %4 : vector<8x64xf32>
    %cst_5 = arith.constant 0.000000e+00 : f32
    %6 = vector.broadcast %cst_5 : f32 to vector<8x64xf32>
    %7 = arith.maximumf %5, %6 : vector<8x64xf32>
    %c0_6 = arith.constant 0 : index
    %c0_7 = arith.constant 0 : index
    %8 = vector.load %arg5[%c0_6, %c0_7] : memref<64x64xf32, #tpu.memory_space<vmem>>, vector<64x64xf32>
    %cst_8 = arith.constant dense<0.000000e+00> : vector<8x64xf32>
    %9 = tpu.matmul %7, %8, %cst_8 {dimension_numbers = #tpu.dot_dimension_numbers<[1], [0], [0], [1], [0, 0, 1, 1], [], []>} : vector<8x64xf32>, vector<64x64xf32>, vector<8x64xf32> -> vector<8x64xf32>
    %c0_9 = arith.constant 0 : index
    %c0_10 = arith.constant 0 : index
    %10 = vector.load %arg6[%c0_9, %c0_10] : memref<1x64xf32, #tpu.memory_space<vmem>>, vector<1x64xf32>
    %11 = vector.broadcast %10 : vector<1x64xf32> to vector<8x64xf32>
    %12 = arith.addf %9, %11 : vector<8x64xf32>
    %cst_11 = arith.constant 0.000000e+00 : f32
    %13 = vector.broadcast %cst_11 : f32 to vector<8x64xf32>
    %14 = arith.maximumf %12, %13 : vector<8x64xf32>
    %c0_12 = arith.constant 0 : index
    %c0_13 = arith.constant 0 : index
    %15 = vector.load %arg7[%c0_12, %c0_13] : memref<64x4xf32, #tpu.memory_space<vmem>>, vector<64x4xf32>
    %cst_14 = arith.constant dense<0.000000e+00> : vector<8x4xf32>
    %16 = tpu.matmul %14, %15, %cst_14 {dimension_numbers = #tpu.dot_dimension_numbers<[1], [0], [0], [1], [0, 0, 1, 1], [], []>} : vector<8x64xf32>, vector<64x4xf32>, vector<8x4xf32> -> vector<8x4xf32>
    %c0_15 = arith.constant 0 : index
    %c0_16 = arith.constant 0 : index
    %17 = vector.load %arg8[%c0_15, %c0_16] : memref<1x4xf32, #tpu.memory_space<vmem>>, vector<1x4xf32>
    %18 = vector.broadcast %17 : vector<1x4xf32> to vector<8x4xf32>
    %19 = arith.addf %16, %18 : vector<8x4xf32>
    %c0_17 = arith.constant 0 : index
    %c0_18 = arith.constant 0 : index
    %20 = vector.load %arg9[%c0_17, %c0_18] : memref<1x4xf32, #tpu.memory_space<vmem>>, vector<1x4xf32>
    %cst_19 = arith.constant -2.000000e+01 : f32
    %cst_20 = arith.constant 2.000000e+00 : f32
    %21 = vector.broadcast %cst_19 : f32 to vector<1x4xf32>
    %22 = arith.maximumf %21, %20 : vector<1x4xf32>
    %23 = vector.broadcast %cst_20 : f32 to vector<1x4xf32>
    %24 = arith.minimumf %23, %22 : vector<1x4xf32>
    %c0_21 = arith.constant 0 : index
    %c0_22 = arith.constant 0 : index
    %25 = vector.load %arg2[%c0_21, %c0_22] : memref<8x4xf32, #tpu.memory_space<vmem>>, vector<8x4xf32>
    %26 = arith.subf %25, %19 : vector<8x4xf32>
    %cst_23 = arith.constant 0.000000e+00 : f32
    %27 = vector.broadcast %cst_23 : f32 to vector<1x4xf32>
    %28 = arith.subf %27, %24 : vector<1x4xf32>
    %29 = math.exp %28 : vector<1x4xf32>
    %30 = vector.broadcast %29 : vector<1x4xf32> to vector<8x4xf32>
    %31 = arith.mulf %26, %30 : vector<8x4xf32>
    %cst_24 = arith.constant -5.000000e-01 : f32
    %32 = vector.broadcast %cst_24 : f32 to vector<8x4xf32>
    %33 = arith.mulf %32, %31 : vector<8x4xf32>
    %34 = arith.mulf %33, %31 : vector<8x4xf32>
    %35 = vector.broadcast %24 : vector<1x4xf32> to vector<8x4xf32>
    %36 = arith.subf %34, %35 : vector<8x4xf32>
    %cst_25 = arith.constant 0.918938517 : f32
    %37 = vector.broadcast %cst_25 : f32 to vector<8x4xf32>
    %38 = arith.subf %36, %37 : vector<8x4xf32>
    %cst_26 = arith.constant dense<0.000000e+00> : vector<8xf32>
    %39 = vector.multi_reduction <add>, %38, %cst_26 [1] : vector<8x4xf32> to vector<8xf32>
    %40 = vector.shape_cast %39 : vector<8xf32> to vector<8x1xf32>
    %41 = tpu.transpose %19, [1, 0] : vector<8x4xf32> -> vector<4x8xf32>
    %c0_27 = arith.constant 0 : index
    %c0_28 = arith.constant 0 : index
    %42 = vector.load %arg10[%c0_27, %c0_28] : memref<4x8xf32, #tpu.memory_space<vmem>>, vector<4x8xf32>
    tpu.vector_store %arg10[%c0_27, %c0_28], %41 {strides = array<i32>} : memref<4x8xf32, #tpu.memory_space<vmem>>, vector<4x8xf32>,
    %43 = tpu.transpose %40, [1, 0] : vector<8x1xf32> -> vector<1x8xf32>
    %c0_29 = arith.constant 0 : index
    %c0_30 = arith.constant 0 : index
    %44 = vector.load %arg11[%c0_29, %c0_30] : memref<1x8xf32, #tpu.memory_space<vmem>>, vector<1x8xf32>
    tpu.vector_store %arg11[%c0_29, %c0_30], %43 {strides = array<i32>} : memref<1x8xf32, #tpu.memory_space<vmem>>, vector<1x8xf32>,
    return
  }
  func.func @transform_0(%arg0: i32) -> (i32, i32) {
    %c0_i32 = arith.constant 0 : i32
    %c0_i32_0 = arith.constant 0 : i32
    return %arg0, %c0_i32 : i32, i32
  }
  func.func @transform_1(%arg0: i32) -> (i32, i32) {
    %c0_i32 = arith.constant 0 : i32
    %c0_i32_0 = arith.constant 0 : i32
    return %arg0, %c0_i32 : i32, i32
  }
  func.func @transform_2(%arg0: i32) -> (i32, i32) {
    %c0_i32 = arith.constant 0 : i32
    %c0_i32_0 = arith.constant 0 : i32
    %c0_i32_1 = arith.constant 0 : i32
    return %c0_i32, %c0_i32_0 : i32, i32
  }
  func.func @transform_3(%arg0: i32) -> (i32, i32) {
    %c0_i32 = arith.constant 0 : i32
    %c0_i32_0 = arith.constant 0 : i32
    %c0_i32_1 = arith.constant 0 : i32
    return %c0_i32, %c0_i32_0 : i32, i32
  }
  func.func @transform_4(%arg0: i32) -> (i32, i32) {
    %c0_i32 = arith.constant 0 : i32
    %c0_i32_0 = arith.constant 0 : i32
    %c0_i32_1 = arith.constant 0 : i32
    return %c0_i32, %c0_i32_0 : i32, i32
  }
  func.func @transform_5(%arg0: i32) -> (i32, i32) {
    %c0_i32 = arith.constant 0 : i32
    %c0_i32_0 = arith.constant 0 : i32
    %c0_i32_1 = arith.constant 0 : i32
    return %c0_i32, %c0_i32_0 : i32, i32
  }
  func.func @transform_6(%arg0: i32) -> (i32, i32) {
    %c0_i32 = arith.constant 0 : i32
    %c0_i32_0 = arith.constant 0 : i32
    %c0_i32_1 = arith.constant 0 : i32
    return %c0_i32, %c0_i32_0 : i32, i32
  }
  func.func @transform_7(%arg0: i32) -> (i32, i32) {
    %c0_i32 = arith.constant 0 : i32
    %c0_i32_0 = arith.constant 0 : i32
    %c0_i32_1 = arith.constant 0 : i32
    return %c0_i32, %c0_i32_0 : i32, i32
  }
  func.func @transform_8(%arg0: i32) -> (i32, i32) {
    %c0_i32 = arith.constant 0 : i32
    %c0_i32_0 = arith.constant 0 : i32
    %c0_i32_1 = arith.constant 0 : i32
    return %c0_i32, %c0_i32_0 : i32, i32
  }
  func.func @transform_9(%arg0: i32) -> (i32, i32) {
    %c0_i32 = arith.constant 0 : i32
    %c0_i32_0 = arith.constant 0 : i32
    return %c0_i32, %arg0 : i32, i32
  }
  func.func @transform_10(%arg0: i32) -> (i32, i32) {
    %c0_i32 = arith.constant 0 : i32
    %c0_i32_0 = arith.constant 0 : i32
    return %c0_i32, %arg0 : i32, i32
  }
}

</mosaic_0001>

<llo_original>
// kernel: tpu_custom_call.1
$region0: #{tpu_custom_call.1}
  #allocation0 [shape = 'u32[]', space=smem, size = 0x4, offset = 0x4, fixed_abs, tag = 'smem constant byte address 0x4 - core index']
  #allocation1 [shape = 'u32[144,128]{1,0:T(1,128)}', space=vmem, size = 0x12000, scoped, tag = 'internal scratch']
  %s0 = inlined_call_operand.hbm [shape: f32[8,16], index: 0, kind: input, shape index: {}]
  %s1 = inlined_call_operand.vmem [shape: f32[8,4], index: 1, kind: input, shape index: {}]
  %s2 = inlined_call_operand.vmem [shape: f32[16,64], index: 2, kind: input, shape index: {}]
  %s3 = inlined_call_operand.vmem [shape: f32[1,64], index: 3, kind: input, shape index: {}]
  %s4 = inlined_call_operand.vmem [shape: f32[64,64], index: 4, kind: input, shape index: {}]
  %s5 = inlined_call_operand.vmem [shape: f32[1,64], index: 5, kind: input, shape index: {}]
  %s6 = inlined_call_operand.vmem [shape: f32[64,4], index: 6, kind: input, shape index: {}]
  %s7 = inlined_call_operand.vmem [shape: f32[1,4], index: 7, kind: input, shape index: {}]
  %s8 = inlined_call_operand.vmem [shape: f32[1,4], index: 8, kind: input, shape index: {}]
  %s9 = inlined_call_operand.hbm [shape: f32[4,8], index: 9, kind: output, shape index: {0}]
  %s10 = inlined_call_operand.hbm [shape: f32[1,8], index: 10, kind: output, shape index: {1}]
  %11 = xla_tuple %s9, %s10
  %s12 = sld [smem:[#allocation0]]
  $region58: #{tpu_custom_call.1} parent=0
    _
  %s14 = ssub.s32 1, %s12
  %s15 = scalar_select 0, %s14, %s12
  $region1: #{tpu_custom_call.1} parent=0
    #allocation2 [shape = 'u8[4096]{0}', space=vmem, size = 0x1000, scoped, tag = 'input window, operand 0, single buffered']
    #allocation3 [shape = 's32[1]{0}', space=sflag, size = 0x4, scoped, tag = 'scoped memory for tpu_custom_call.1']
    #allocation4 [shape = 's32[1]{0}', space=sflag, size = 0x4, scoped, tag = 'scoped memory for tpu_custom_call.1']
    #allocation5 [shape = 'u8[2048]{0}', space=vmem, size = 0x800, scoped, tag = 'output window, operand 0, single buffered']
    #allocation6 [shape = 'u8[512]{0}', space=vmem, size = 0x400, scoped, tag = 'output window, operand 1, single buffered']
    #allocation7 [shape = 's32[1]{0}', space=sflag, size = 0x4, scoped, tag = 'scoped memory for tpu_custom_call.1']
    %16 = vsyncpa [#allocation3], 0
    %17 = vsyncpa [#allocation4], 0
    %18 = vsyncpa [#allocation7], 0
    // Predicated region
    $region2: #{tpu_custom_call.1} parent=1 // pred_check
      _
    $region3: #{tpu_custom_call.1} parent=1 // pred_check_branch
      %20 = sbr.rel (0) target = $region5
    $region4: #{tpu_custom_call.1} parent=1 // pred_region
      %s22 = ssub.s32 128, 128
      %23 = vsyncadd [#allocation3], %s22
      %s25 = sshll.u32 [#allocation2], 4
      %s26 = int_to_ptr.vmem [resolvable:$true] %s25
      %28 = dma.hbm_to_vmem [thread:$0]  %s0, 128, %s26, [#allocation3]
    $region5: #{tpu_custom_call.1} parent=1 // pred_fallthru
      _
    // Predicated region
    $region6: #{tpu_custom_call.1} parent=1 // pred_check
      _
    $region7: #{tpu_custom_call.1} parent=1 // pred_check_branch
      %30 = sbr.rel (0) target = $region9
    $region8: #{tpu_custom_call.1} parent=1 // pred_region
      _
    $region9: #{tpu_custom_call.1} parent=1 // pred_fallthru
      _
    // Predicated region
    $region10: #{tpu_custom_call.1} parent=1 // pred_check
      _
    $region11: #{tpu_custom_call.1} parent=1 // pred_check_branch
      %32 = sbr.rel (0) target = $region13
    $region12: #{tpu_custom_call.1} parent=1 // pred_region
      _
    $region13: #{tpu_custom_call.1} parent=1 // pred_fallthru
      _
    // Predicated region
    $region14: #{tpu_custom_call.1} parent=1 // pred_check
      _
    $region15: #{tpu_custom_call.1} parent=1 // pred_check_branch
      %34 = sbr.rel (0) target = $region17
    $region16: #{tpu_custom_call.1} parent=1 // pred_region
      _
    $region17: #{tpu_custom_call.1} parent=1 // pred_fallthru
      _
    // Predicated region
    $region18: #{tpu_custom_call.1} parent=1 // pred_check
      _
    $region19: #{tpu_custom_call.1} parent=1 // pred_check_branch
      %36 = sbr.rel (0) target = $region21
    $region20: #{tpu_custom_call.1} parent=1 // pred_region
      _
    $region21: #{tpu_custom_call.1} parent=1 // pred_fallthru
      _
    // Predicated region
    $region22: #{tpu_custom_call.1} parent=1 // pred_check
      _
    $region23: #{tpu_custom_call.1} parent=1 // pred_check_branch
      %38 = sbr.rel (0) target = $region25
    $region24: #{tpu_custom_call.1} parent=1 // pred_region
      _
    $region25: #{tpu_custom_call.1} parent=1 // pred_fallthru
      _
    // Predicated region
    $region26: #{tpu_custom_call.1} parent=1 // pred_check
      _
    $region27: #{tpu_custom_call.1} parent=1 // pred_check_branch
      %40 = sbr.rel (0) target = $region29
    $region28: #{tpu_custom_call.1} parent=1 // pred_region
      _
    $region29: #{tpu_custom_call.1} parent=1 // pred_fallthru
      _
    // Predicated region
    $region30: #{tpu_custom_call.1} parent=1 // pred_check
      _
    $region31: #{tpu_custom_call.1} parent=1 // pred_check_branch
      %42 = sbr.rel (0) target = $region33
    $region32: #{tpu_custom_call.1} parent=1 // pred_region
      _
    $region33: #{tpu_custom_call.1} parent=1 // pred_fallthru
      _
    // Predicated region
    $region34: #{tpu_custom_call.1} parent=1 // pred_check
      _
    $region35: #{tpu_custom_call.1} parent=1 // pred_check_branch
      %44 = sbr.rel (0) target = $region37
    $region36: #{tpu_custom_call.1} parent=1 // pred_region
      _
    $region37: #{tpu_custom_call.1} parent=1 // pred_fallthru
      _
    // Predicated region
    $region38: #{tpu_custom_call.1} parent=1 // pred_check
      _
    $region39: #{tpu_custom_call.1} parent=1 // pred_check_branch
      %46 = sbr.rel (0) target = $region41
    $region40: #{tpu_custom_call.1} parent=1 // pred_region
      %47 = dma.done [#allocation3], 128
    $region41: #{tpu_custom_call.1} parent=1 // pred_fallthru
      _
    %v48 = vld [vmem:[#allocation2] sm:$0xff]
    %v49 = vld [vmem:[%s2] sm:$0xff]
    %v50 = vld [vmem:[%s2 + $0x8] sm:$0xff]
    %v51 = vld [vmem:[%s3] sm:$0x1]
    %v53 = vlaneseq
    %v54 = vshrl.u32 %v53, 7
    %v55 = vsub.s32 0, %v54
    %v56 = vrot.slane %v51, %v55
    %vm58 = vcmask 130048
    %v60 = vsel %vm58, %v48, 0
    %62 = vmatprep.subr.mxu0 0.0
    %63 = vmatpush1.msra.mxu0 0.0
    %64 = vmatprep.subr.mxu0 0.0
    %65 = vmatpush1.msra.mxu0 0.0
    %66 = vmatprep.subr.mxu0 0.0
    %67 = vmatpush1.msra.mxu0 0.0
    %68 = vmatprep.subr.mxu0 0.0
    %69 = vmatpush1.msra.mxu0 0.0
    %70 = vmatprep.subr.mxu0 0.0
    %71 = vmatpush1.msra.mxu0 0.0
    %72 = vmatprep.subr.mxu0 0.0
    %73 = vmatpush1.msra.mxu0 0.0
    %74 = vmatprep.subr.mxu0 0.0
    %75 = vmatpush1.msra.mxu0 0.0
    %76 = vmatprep.subr.mxu0 0.0
    %77 = vmatpush1.msra.mxu0 0.0
    %78 = vmatprep.subr.mxu0 0.0
    %79 = vmatpush1.msra.mxu0 0.0
    %80 = vmatprep.subr.mxu0 0.0
    %81 = vmatpush1.msra.mxu0 0.0
    %82 = vmatprep.subr.mxu0 0.0
    %83 = vmatpush1.msra.mxu0 0.0
    %84 = vmatprep.subr.mxu0 0.0
    %85 = vmatpush1.msra.mxu0 0.0
    %86 = vmatprep.subr.mxu0 0.0
    %87 = vmatpush1.msra.mxu0 0.0
    %88 = vmatprep.subr.mxu0 0.0
    %89 = vmatpush1.msra.mxu0 0.0
    %90 = vmatprep.subr.mxu0 0.0
    %91 = vmatpush1.msra.mxu0 %v50
    %92 = vmatprep.subr.mxu0 0.0
    %93 = vmatpush1.msra.mxu0 %v49
    %94 = vmatprep.subr.mxu0 0.0
    %95 = vmatpush2.msra.mxu0 0.0
    %96 = vmatprep.subr.mxu0 0.0
    %97 = vmatpush2.msra.mxu0 0.0
    %98 = vmatprep.subr.mxu0 0.0
    %99 = vmatpush2.msra.mxu0 0.0
    %100 = vmatprep.subr.mxu0 0.0
    %101 = vmatpush2.msra.mxu0 0.0
    %102 = vmatprep.subr.mxu0 0.0
    %103 = vmatpush2.msra.mxu0 0.0
    %104 = vmatprep.subr.mxu0 0.0
    %105 = vmatpush2.msra.mxu0 0.0
    %106 = vmatprep.subr.mxu0 0.0
    %107 = vmatpush2.msra.mxu0 0.0
    %108 = vmatprep.subr.mxu0 0.0
    %109 = vmatpush2.msra.mxu0 0.0
    %110 = vmatprep.subr.mxu0 0.0
    %111 = vmatpush2.msra.mxu0 0.0
    %112 = vmatprep.subr.mxu0 0.0
    %113 = vmatpush2.msra.mxu0 0.0
    %114 = vmatprep.subr.mxu0 0.0
    %115 = vmatpush2.msra.mxu0 0.0
    %116 = vmatprep.subr.mxu0 0.0
    %117 = vmatpush2.msra.mxu0 0.0
    %118 = vmatprep.subr.mxu0 0.0
    %119 = vmatpush2.msra.mxu0 0.0
    %120 = vmatprep.subr.mxu0 0.0
    %121 = vmatpush2.msra.mxu0 0.0
    %122 = vmatprep.subr.mxu0 0.0
    %123 = vmatpush2.msra.mxu0 0.0
    %124 = vmatprep.subr.mxu0 0.0
    %125 = vmatpush2.msra.mxu0 0.0
    %126 = vmatprep.mubr.f32.mxu0 0.0
    %127 = vmatmul.mubr.f32.gmra.mxu0 %v60
    %v128 = vpop.f32.mrf.mxu0
    %v129 = vadd.f32 %v56, %v128
    %v130 = vpop.f32.mrf.mxu0
    %131 = vdwg.mxu0
    %v132 = vmax.f32 %v129, 0.0
    %v133 = vld [vmem:[%s4] sm:$0xff]
    %v134 = vld [vmem:[%s4 + $0x8] sm:$0xff]
    %v135 = vld [vmem:[%s4 + $0x10] sm:$0xff]
    %v136 = vld [vmem:[%s4 + $0x18] sm:$0xff]
    %v137 = vld [vmem:[%s4 + $0x20] sm:$0xff]
    %v138 = vld [vmem:[%s4 + $0x28] sm:$0xff]
    %v139 = vld [vmem:[%s4 + $0x30] sm:$0xff]
    %v140 = vld [vmem:[%s4 + $0x38] sm:$0xff]
    %v141 = vld [vmem:[%s5] sm:$0x1]
    %v143 = vlaneseq
    %v144 = vshrl.u32 %v143, 7
    %v145 = vsub.s32 0, %v144
    %v146 = vrot.slane %v141, %v145
    %vm148 = vcmask 523264
    %v150 = vsel %vm148, %v132, 0
    %152 = vmatprep.subr.mxu0 0.0
    %153 = vmatpush1.msra.mxu0 0.0
    %154 = vmatprep.subr.mxu0 0.0
    %155 = vmatpush1.msra.mxu0 0.0
    %156 = vmatprep.subr.mxu0 0.0
    %157 = vmatpush1.msra.mxu0 0.0
    %158 = vmatprep.subr.mxu0 0.0
    %159 = vmatpush1.msra.mxu0 0.0
    %160 = vmatprep.subr.mxu0 0.0
    %161 = vmatpush1.msra.mxu0 0.0
    %162 = vmatprep.subr.mxu0 0.0
    %163 = vmatpush1.msra.mxu0 0.0
    %164 = vmatprep.subr.mxu0 0.0
    %165 = vmatpush1.msra.mxu0 0.0
    %166 = vmatprep.subr.mxu0 0.0
    %167 = vmatpush1.msra.mxu0 0.0
    %168 = vmatprep.subr.mxu0 0.0
    %169 = vmatpush1.msra.mxu0 %v140
    %170 = vmatprep.subr.mxu0 0.0
    %171 = vmatpush1.msra.mxu0 %v139
    %172 = vmatprep.subr.mxu0 0.0
    %173 = vmatpush1.msra.mxu0 %v138
    %174 = vmatprep.subr.mxu0 0.0
    %175 = vmatpush1.msra.mxu0 %v137
    %176 = vmatprep.subr.mxu0 0.0
    %177 = vmatpush1.msra.mxu0 %v136
    %178 = vmatprep.subr.mxu0 0.0
    %179 = vmatpush1.msra.mxu0 %v135
    %180 = vmatprep.subr.mxu0 0.0
    %181 = vmatpush1.msra.mxu0 %v134
    %182 = vmatprep.subr.mxu0 0.0
    %183 = vmatpush1.msra.mxu0 %v133
    %184 = vmatprep.subr.mxu0 0.0
    %185 = vmatpush2.msra.mxu0 0.0
    %186 = vmatprep.subr.mxu0 0.0
    %187 = vmatpush2.msra.mxu0 0.0
    %188 = vmatprep.subr.mxu0 0.0
    %189 = vmatpush2.msra.mxu0 0.0
    %190 = vmatprep.subr.mxu0 0.0
    %191 = vmatpush2.msra.mxu0 0.0
    %192 = vmatprep.subr.mxu0 0.0
    %193 = vmatpush2.msra.mxu0 0.0
    %194 = vmatprep.subr.mxu0 0.0
    %195 = vmatpush2.msra.mxu0 0.0
    %196 = vmatprep.subr.mxu0 0.0
    %197 = vmatpush2.msra.mxu0 0.0
    %198 = vmatprep.subr.mxu0 0.0
    %199 = vmatpush2.msra.mxu0 0.0
    %200 = vmatprep.subr.mxu0 0.0
    %201 = vmatpush2.msra.mxu0 0.0
    %202 = vmatprep.subr.mxu0 0.0
    %203 = vmatpush2.msra.mxu0 0.0
    %204 = vmatprep.subr.mxu0 0.0
    %205 = vmatpush2.msra.mxu0 0.0
    %206 = vmatprep.subr.mxu0 0.0
    %207 = vmatpush2.msra.mxu0 0.0
    %208 = vmatprep.subr.mxu0 0.0
    %209 = vmatpush2.msra.mxu0 0.0
    %210 = vmatprep.subr.mxu0 0.0
    %211 = vmatpush2.msra.mxu0 0.0
    %212 = vmatprep.subr.mxu0 0.0
    %213 = vmatpush2.msra.mxu0 0.0
    %214 = vmatprep.subr.mxu0 0.0
    %215 = vmatpush2.msra.mxu0 0.0
    %216 = vmatprep.mubr.f32.mxu0 0.0
    %217 = vmatmul.mubr.f32.gmra.mxu0 %v150
    %v218 = vpop.f32.mrf.mxu0
    %v219 = vadd.f32 %v146, %v218
    %v220 = vpop.f32.mrf.mxu0
    %221 = vdwg.mxu0
    %v222 = vmax.f32 %v219, 0.0
    %v223 = vld [vmem:[%s6] sm:$0xff]
    %v224 = vld [vmem:[%s6 + $0x8] sm:$0xff]
    %v225 = vld [vmem:[%s6 + $0x10] sm:$0xff]
    %v226 = vld [vmem:[%s6 + $0x18] sm:$0xff]
    %v227 = vld [vmem:[%s6 + $0x20] sm:$0xff]
    %v228 = vld [vmem:[%s6 + $0x28] sm:$0xff]
    %v229 = vld [vmem:[%s6 + $0x30] sm:$0xff]
    %v230 = vld [vmem:[%s6 + $0x38] sm:$0xff]
    %v231 = vld [vmem:[%s7] sm:$0x1]
    %v233 = vlaneseq
    %v234 = vshrl.u32 %v233, 7
    %v235 = vsub.s32 0, %v234
    %v236 = vrot.slane %v231, %v235
    %v239 = vsel %vm148, %v222, 0
    %241 = vmatprep.subr.mxu0 0.0
    %242 = vmatpush1.msra.mxu0 0.0
    %243 = vmatprep.subr.mxu0 0.0
    %244 = vmatpush1.msra.mxu0 0.0
    %245 = vmatprep.subr.mxu0 0.0
    %246 = vmatpush1.msra.mxu0 0.0
    %247 = vmatprep.subr.mxu0 0.0
    %248 = vmatpush1.msra.mxu0 0.0
    %249 = vmatprep.subr.mxu0 0.0
    %250 = vmatpush1.msra.mxu0 0.0
    %251 = vmatprep.subr.mxu0 0.0
    %252 = vmatpush1.msra.mxu0 0.0
    %253 = vmatprep.subr.mxu0 0.0
    %254 = vmatpush1.msra.mxu0 0.0
    %255 = vmatprep.subr.mxu0 0.0
    %256 = vmatpush1.msra.mxu0 0.0
    %257 = vmatprep.subr.mxu0 0.0
    %258 = vmatpush1.msra.mxu0 %v230
    %259 = vmatprep.subr.mxu0 0.0
    %260 = vmatpush1.msra.mxu0 %v229
    %261 = vmatprep.subr.mxu0 0.0
    %262 = vmatpush1.msra.mxu0 %v228
    %263 = vmatprep.subr.mxu0 0.0
    %264 = vmatpush1.msra.mxu0 %v227
    %265 = vmatprep.subr.mxu0 0.0
    %266 = vmatpush1.msra.mxu0 %v226
    %267 = vmatprep.subr.mxu0 0.0
    %268 = vmatpush1.msra.mxu0 %v225
    %269 = vmatprep.subr.mxu0 0.0
    %270 = vmatpush1.msra.mxu0 %v224
    %271 = vmatprep.subr.mxu0 0.0
    %272 = vmatpush1.msra.mxu0 %v223
    %273 = vmatprep.subr.mxu0 0.0
    %274 = vmatpush2.msra.mxu0 0.0
    %275 = vmatprep.subr.mxu0 0.0
    %276 = vmatpush2.msra.mxu0 0.0
    %277 = vmatprep.subr.mxu0 0.0
    %278 = vmatpush2.msra.mxu0 0.0
    %279 = vmatprep.subr.mxu0 0.0
    %280 = vmatpush2.msra.mxu0 0.0
    %281 = vmatprep.subr.mxu0 0.0
    %282 = vmatpush2.msra.mxu0 0.0
    %283 = vmatprep.subr.mxu0 0.0
    %284 = vmatpush2.msra.mxu0 0.0
    %285 = vmatprep.subr.mxu0 0.0
    %286 = vmatpush2.msra.mxu0 0.0
    %287 = vmatprep.subr.mxu0 0.0
    %288 = vmatpush2.msra.mxu0 0.0
    %289 = vmatprep.subr.mxu0 0.0
    %290 = vmatpush2.msra.mxu0 0.0
    %291 = vmatprep.subr.mxu0 0.0
    %292 = vmatpush2.msra.mxu0 0.0
    %293 = vmatprep.subr.mxu0 0.0
    %294 = vmatpush2.msra.mxu0 0.0
    %295 = vmatprep.subr.mxu0 0.0
    %296 = vmatpush2.msra.mxu0 0.0
    %297 = vmatprep.subr.mxu0 0.0
    %298 = vmatpush2.msra.mxu0 0.0
    %299 = vmatprep.subr.mxu0 0.0
    %300 = vmatpush2.msra.mxu0 0.0
    %301 = vmatprep.subr.mxu0 0.0
    %302 = vmatpush2.msra.mxu0 0.0
    %303 = vmatprep.subr.mxu0 0.0
    %304 = vmatpush2.msra.mxu0 0.0
    %305 = vmatprep.mubr.f32.mxu0 0.0
    %306 = vmatmul.mubr.f32.gmra.mxu0 %v239
    %v307 = vpop.f32.mrf.mxu0
    %v308 = vadd.f32 %v236, %v307
    %v309 = vpop.f32.mrf.mxu0
    %310 = vdwg.mxu0
    %v311 = vld [vmem:[%s8] sm:$0x1]
    %v312 = vmax.f32 %v311, -20.0
    %v313 = vmin.f32 %v312, 2.0
    %v314 = vld [vmem:[%s1] sm:$0xff]
    %v315 = vsub.f32 %v314, %v308
    %v316 = vsub.f32 0.0, %v313
    %v317 = vmul.f32 %v316, 1.442695
    %v318 = vpow.pop %v317
    %v320 = vlaneseq
    %v321 = vshrl.u32 %v320, 7
    %v322 = vsub.s32 0, %v321
    %v323 = vrot.slane %v318, %v322
    %v325 = vmul.f32 %v315, %v323
    %v326 = vmul.f32 %v325, -0.5
    %v327 = vmul.f32 %v326, %v325
    %v329 = vlaneseq
    %v330 = vshrl.u32 %v329, 7
    %v331 = vsub.s32 0, %v330
    %v332 = vrot.slane %v313, %v331
    %v334 = vsub.f32 %v327, %v332
    %v335 = vsub.f32 %v334, 0.9189385
    %vm336 = vcmask 31744
    %v337 = vsel %vm336, %v335, 0.0
    %338 = vadd.xlane.f32.xlu0 %v337
    %v339 = vpop.xlane.xlu0 %338
    %340 = vxpose.xlu0.b32.start [1/16] %v308, 128
    %341 = vxpose.xlu0.b32.cont [2/16] 0.0, 128
    %342 = vxpose.xlu0.b32.cont [3/16] 0.0, 128
    %343 = vxpose.xlu0.b32.cont [4/16] 0.0, 128
    %344 = vxpose.xlu0.b32.cont [5/16] 0.0, 128
    %345 = vxpose.xlu0.b32.cont [6/16] 0.0, 128
    %346 = vxpose.xlu0.b32.cont [7/16] 0.0, 128
    %347 = vxpose.xlu0.b32.cont [8/16] 0.0, 128
    %348 = vxpose.xlu0.b32.cont [9/16] 0.0, 128
    %349 = vxpose.xlu0.b32.cont [10/16] 0.0, 128
    %350 = vxpose.xlu0.b32.cont [11/16] 0.0, 128
    %351 = vxpose.xlu0.b32.cont [12/16] 0.0, 128
    %352 = vxpose.xlu0.b32.cont [13/16] 0.0, 128
    %353 = vxpose.xlu0.b32.cont [14/16] 0.0, 128
    %354 = vxpose.xlu0.b32.cont [15/16] 0.0, 128
    %355 = vxpose.xlu0.b32.end [16/16] 0.0, 128
    %v356 = vpop.trf.xlu0
    %v357 = vpop.trf.xlu0
    %v358 = vpop.trf.xlu0
    %v359 = vpop.trf.xlu0
    %v360 = vpop.trf.xlu0
    %v361 = vpop.trf.xlu0
    %v362 = vpop.trf.xlu0
    %v363 = vpop.trf.xlu0
    %v364 = vpop.trf.xlu0
    %v365 = vpop.trf.xlu0
    %v366 = vpop.trf.xlu0
    %v367 = vpop.trf.xlu0
    %v368 = vpop.trf.xlu0
    %v369 = vpop.trf.xlu0
    %v370 = vpop.trf.xlu0
    %v371 = vpop.trf.xlu0
    %vm372 = vcmask 60416
    %373 = vst.msk [vmem:[#allocation5] sm:$0xf] %vm372, %v356
    %374 = vxpose.xlu0.b32.start [1/16] %v339, 128
    %375 = vxpose.xlu0.b32.cont [2/16] 0.0, 128
    %376 = vxpose.xlu0.b32.cont [3/16] 0.0, 128
    %377 = vxpose.xlu0.b32.cont [4/16] 0.0, 128
    %378 = vxpose.xlu0.b32.cont [5/16] 0.0, 128
    %379 = vxpose.xlu0.b32.cont [6/16] 0.0, 128
    %380 = vxpose.xlu0.b32.cont [7/16] 0.0, 128
    %381 = vxpose.xlu0.b32.cont [8/16] 0.0, 128
    %382 = vxpose.xlu0.b32.cont [9/16] 0.0, 128
    %383 = vxpose.xlu0.b32.cont [10/16] 0.0, 128
    %384 = vxpose.xlu0.b32.cont [11/16] 0.0, 128
    %385 = vxpose.xlu0.b32.cont [12/16] 0.0, 128
    %386 = vxpose.xlu0.b32.cont [13/16] 0.0, 128
    %387 = vxpose.xlu0.b32.cont [14/16] 0.0, 128
    %388 = vxpose.xlu0.b32.cont [15/16] 0.0, 128
    %389 = vxpose.xlu0.b32.end [16/16] 0.0, 128
    %v390 = vpop.trf.xlu0
    %v391 = vpop.trf.xlu0
    %v392 = vpop.trf.xlu0
    %v393 = vpop.trf.xlu0
    %v394 = vpop.trf.xlu0
    %v395 = vpop.trf.xlu0
    %v396 = vpop.trf.xlu0
    %v397 = vpop.trf.xlu0
    %v398 = vpop.trf.xlu0
    %v399 = vpop.trf.xlu0
    %v400 = vpop.trf.xlu0
    %v401 = vpop.trf.xlu0
    %v402 = vpop.trf.xlu0
    %v403 = vpop.trf.xlu0
    %v404 = vpop.trf.xlu0
    %v405 = vpop.trf.xlu0
    %vm406 = vcmask 57344
    %407 = vst.msk [vmem:[#allocation6] sm:$0x1] %vm406, %v390
    // Predicated region
    $region42: #{tpu_custom_call.1} parent=1 // pred_check
      _
    $region43: #{tpu_custom_call.1} parent=1 // pred_check_branch
      %409 = sbr.rel (0) target = $region45
    $region44: #{tpu_custom_call.1} parent=1 // pred_region
      %s411 = ssub.s32 64, 64
      %412 = vsyncadd [#allocation4], %s411
      %s414 = sshll.u32 [#allocation5], 4
      %s415 = int_to_ptr.vmem [resolvable:$true] %s414
      %417 = dma.vmem_to_hbm [thread:$0]  %s415, 64, %s9, [#allocation4]
    $region45: #{tpu_custom_call.1} parent=1 // pred_fallthru
      _
    // Predicated region
    $region46: #{tpu_custom_call.1} parent=1 // pred_check
      _
    $region47: #{tpu_custom_call.1} parent=1 // pred_check_branch
      %419 = sbr.rel (0) target = $region49
    $region48: #{tpu_custom_call.1} parent=1 // pred_region
      %s421 = ssub.s32 16, 16
      %422 = vsyncadd [#allocation7], %s421
      %s424 = sshll.u32 [#allocation6], 4
      %s425 = int_to_ptr.vmem [resolvable:$true] %s424
      %427 = dma.vmem_to_hbm [thread:$0]  %s425, 16, %s10, [#allocation7]
    $region49: #{tpu_custom_call.1} parent=1 // pred_fallthru
      _
    // Predicated region
    $region50: #{tpu_custom_call.1} parent=1 // pred_check
      _
    $region51: #{tpu_custom_call.1} parent=1 // pred_check_branch
      %429 = sbr.rel (0) target = $region53
    $region52: #{tpu_custom_call.1} parent=1 // pred_region
      %430 = dma.done [#allocation4], 64
    $region53: #{tpu_custom_call.1} parent=1 // pred_fallthru
      _
    // Predicated region
    $region54: #{tpu_custom_call.1} parent=1 // pred_check
      _
    $region55: #{tpu_custom_call.1} parent=1 // pred_check_branch
      %432 = sbr.rel (0) target = $region57
    $region56: #{tpu_custom_call.1} parent=1 // pred_region
      %433 = dma.done [#allocation7], 16
    $region57: #{tpu_custom_call.1} parent=1 // pred_fallthru
      _
    %434 = vsyncpa [#allocation3], 1
    %435 = vsyncpa [#allocation4], 1
    %436 = vsyncpa [#allocation7], 1

</llo_original>
